<compile_context>
chip_gen: v7x
topology: tpu7x:2x2x1
jax: 0.10.0
libtpu: 0.0.40
codegen_flags: <defaults>
</compile_context>

<pallas_src>
import jax
import jax.numpy as jnp
from jax.experimental import pallas as pl
from jax.experimental.pallas import tpu as pltpu

_LANES = 128            # lane width: output last dim is a multiple of 128
_MAX_TILE_ROWS = 1024   # 1024 x 128 f32 = 512 KiB output block per grid step


def _round_up(x, m):
    return ((x + m - 1) // m) * m


def _broadcast_kernel(inv_s_ref, o_ref):
    # inv_s_ref: SMEM (1,) f32 holding exp(variance * 10), computed once in the
    #            wrapper.
    # o_ref:     VMEM (tile_rows, 128) lane-dense output block -- write-only,
    #            full unmasked vector stores.
    o_ref[...] = jnp.full(o_ref.shape, inv_s_ref[0], dtype=o_ref.dtype)
    # TODO(synk): `modulate` clamp (inv_s.clamp_max(mod_val)) is a training-time
    # scheduling branch driven by update_step(); not part of the default
    # (modulate=False) forward pass, so it is omitted here.


def variance_network_forward(x, variance):
    """Forward of VarianceNetwork: ones([len(x), 1]) * exp(variance * 10).

    x:        (N, ...) array; only its leading dimension N is consumed.
    variance: scalar parameter (shape () or (1,)).
    Returns:  (N, 1) float32.
    """
    n = int(x.shape[0])

    # Hoist the scalar transcendental out of the kernel: one exp, done once.
    inv_s = jnp.exp(jnp.reshape(variance, (1,)).astype(jnp.float32) * 10.0)

    # Lane-dense padded layout for the kernel output.
    rows_needed = pl.cdiv(n, _LANES)                     # rows of 128 lanes
    tile_rows = min(_MAX_TILE_ROWS, _round_up(rows_needed, 8))
    rows_padded = _round_up(rows_needed, tile_rows)      # grid divides evenly
    grid = (rows_padded // tile_rows,)

    out_padded = pl.pallas_call(
        _broadcast_kernel,
        out_shape=jax.ShapeDtypeStruct((rows_padded, _LANES), jnp.float32),
        grid=grid,
        in_specs=[pl.BlockSpec(memory_space=pltpu.MemorySpace.SMEM)],
        out_specs=pl.BlockSpec((tile_rows, _LANES), lambda i: (i, 0)),
        compiler_params=pltpu.CompilerParams(
            dimension_semantics=("parallel",)),          # shard over TCs (v7x)
    )(inv_s)

    # Back to the PyTorch [len(x), 1] shape (cheap XLA reshape/slice).
    return out_padded.reshape(-1)[:n].reshape(n, 1)


if __name__ == "__main__":
    key = jax.random.PRNGKey(0)

    # Deterministic parameter init, mimicking config.init_val (0.3 as in NeuS).
    init_val = 0.3
    variance = jnp.array([init_val], dtype=jnp.float32)

    ok = True
    for n_rows in (8, 300):
        x = jax.random.normal(key, (n_rows, 3), dtype=jnp.float32)

        out = variance_network_forward(x, variance)
        out = jax.block_until_ready(out)

        # Reference check: ones([N,1]) * exp(variance * 10)
        ref = jnp.ones((n_rows, 1), dtype=jnp.float32) * jnp.exp(variance * 10.0)
        ok &= (out.shape == (n_rows, 1))
        ok &= (out.dtype == jnp.float32)
        ok &= bool(jnp.allclose(out, ref, rtol=1e-6, atol=1e-6))

    assert ok
    print("KERNEL_OK")
</pallas_src>

<mosaic_0001>
module attributes {stable_mosaic.version = 11 : i64} {
  func.func @_broadcast_kernel(%arg0: i32, %arg1: memref<1xf32, #tpu.memory_space<smem>>, %arg2: memref<8x128xf32, #tpu.memory_space<vmem>>) attributes {dimension_semantics = [#tpu.dimension_semantics<parallel>], iteration_bounds = array<i64: 1>, scalar_prefetch = 0 : i64, scratch_operands = 0 : i64, tpu.core_type = #tpu.core_type<tc>, window_params = [{transform_indices = @transform_0, window_bounds = array<i64: 1>}, {transform_indices = @transform_1, window_bounds = array<i64: 8, 128>}]} {
    %c0 = arith.constant 0 : index
    %0 = memref.load %arg1[%c0] : memref<1xf32, #tpu.memory_space<smem>>
    %1 = vector.broadcast %0 : f32 to vector<8x128xf32>
    %c0_0 = arith.constant 0 : index
    %c0_1 = arith.constant 0 : index
    %2 = vector.load %arg2[%c0_0, %c0_1] : memref<8x128xf32, #tpu.memory_space<vmem>>, vector<8x128xf32>
    tpu.vector_store %arg2[%c0_0, %c0_1], %1 {strides = array<i32>} : memref<8x128xf32, #tpu.memory_space<vmem>>, vector<8x128xf32>,
    return
  }
  func.func @transform_0(%arg0: i32) -> i32 {
    %c0_i32 = arith.constant 0 : i32
    %c0_i32_0 = arith.constant 0 : i32
    return %c0_i32 : i32
  }
  func.func @transform_1(%arg0: i32) -> (i32, i32) {
    %c0_i32 = arith.constant 0 : i32
    %c0_i32_0 = arith.constant 0 : i32
    return %arg0, %c0_i32 : i32, i32
  }
}

</mosaic_0001>

<llo_original>
// kernel: tpu_custom_call.1
$region0: #{tpu_custom_call.1}
  #allocation0 [shape = 'u32[]', space=smem, size = 0x4, offset = 0x4, fixed_abs, tag = 'smem constant byte address 0x4 - core index']
  #allocation1 [shape = 'u32[144,128]{1,0:T(1,128)}', space=vmem, size = 0x12000, scoped, tag = 'internal scratch']
  #allocation2 [shape = 'f32[1]{0:T(128)S(6)}', space=smem, size = 0x200, scoped, tag = 'scoped memory for tpu_custom_call.1']
  %s0 = inlined_call_operand.<no memory space> [shape: f32[1], index: 0, kind: input, shape index: {}]
  %s1 = inlined_call_operand.hbm [shape: f32[8,128], index: 1, kind: output, shape index: {}]
  %s2 = sld [smem:[#allocation0]]
  $region14: #{tpu_custom_call.1} parent=0
    _
  %s4 = ssub.s32 1, %s2
  %s5 = scalar_select 0, %s4, %s2
  %6 = sst [smem:[#allocation2]] %s0
  $region1: #{tpu_custom_call.1} parent=0
    #allocation3 [shape = 'u8[4096]{0}', space=vmem, size = 0x1000, scoped, tag = 'output window, operand 0, single buffered']
    #allocation4 [shape = 's32[1]{0}', space=sflag, size = 0x4, scoped, tag = 'scoped memory for tpu_custom_call.1']
    %7 = vsyncpa [#allocation4], 0
    // Predicated region
    $region2: #{tpu_custom_call.1} parent=1 // pred_check
      _
    $region3: #{tpu_custom_call.1} parent=1 // pred_check_branch
      %9 = sbr.rel (0) target = $region5
    $region4: #{tpu_custom_call.1} parent=1 // pred_region
      _
    $region5: #{tpu_custom_call.1} parent=1 // pred_fallthru
      _
    %s10 = sld [smem:[#allocation2]]
    %v11 = vstv %s10
    %12 = vst [vmem:[#allocation3] sm:$0xff] %v11
    // Predicated region
    $region6: #{tpu_custom_call.1} parent=1 // pred_check
      _
    $region7: #{tpu_custom_call.1} parent=1 // pred_check_branch
      %14 = sbr.rel (0) target = $region9
    $region8: #{tpu_custom_call.1} parent=1 // pred_region
      %s16 = ssub.s32 128, 128
      %17 = vsyncadd [#allocation4], %s16
      %s19 = sshll.u32 [#allocation3], 4
      %s20 = int_to_ptr.vmem [resolvable:$true] %s19
      %22 = dma.vmem_to_hbm [thread:$0]  %s20, 128, %s1, [#allocation4]
    $region9: #{tpu_custom_call.1} parent=1 // pred_fallthru
      _
    // Predicated region
    $region10: #{tpu_custom_call.1} parent=1 // pred_check
      _
    $region11: #{tpu_custom_call.1} parent=1 // pred_check_branch
      %24 = sbr.rel (0) target = $region13
    $region12: #{tpu_custom_call.1} parent=1 // pred_region
      %25 = dma.done [#allocation4], 128
    $region13: #{tpu_custom_call.1} parent=1 // pred_fallthru
      _
    %26 = vsyncpa [#allocation4], 1

</llo_original>
